<compile_context>
chip_gen: v7x
topology: tpu7x:2x2x1
jax: 0.10.0
libtpu: 0.0.40
codegen_flags: <defaults>
</compile_context>

<pallas_src>
import jax
import jax.numpy as jnp
from jax import lax
from jax.experimental import pallas as pl
from jax.experimental.pallas import tpu as pltpu


def _cdiv(a: int, b: int) -> int:
    return -(-a // b)


def _round_up(a: int, m: int) -> int:
    return _cdiv(a, m) * m


def _vmem_budget_bytes() -> int:
    """Generation-aware scoped-VMEM budget (headroom left for Mosaic scratch)."""
    try:
        cap = int(pltpu.get_tpu_info().vmem_capacity_bytes)
    except Exception:
        cap = 64 * 1024 * 1024            # conservative default: v7x per-core VMEM
    # ~75% of physical, capped: v5e/v6e -> ~96 MiB, v7x -> ~48 MiB.
    return min(cap * 3 // 4, 100 * 1024 * 1024)


def _stats_kernel(tile_n: int, n_valid: int, eps: float):
    """Per-feature BN batch stats -> folded affine (scale, shift)."""

    def kernel(x_ref, w1_ref, gamma_ref, beta_ref, ss_ref, sum_ref, sumsq_ref):
        i = pl.program_id(0)

        @pl.when(i == 0)
        def _init():
            sum_ref[...] = jnp.zeros_like(sum_ref)
            sumsq_ref[...] = jnp.zeros_like(sumsq_ref)

        # Layer 1 on the MXU: bf16 operands (cast in-kernel), f32 accumulation.
        # b1 is intentionally omitted: it cancels in training-mode BatchNorm.
        h = jnp.dot(x_ref[...].astype(jnp.bfloat16), w1_ref[...],
                    preferred_element_type=jnp.float32)

        # Mask rows beyond the true batch size out of the statistics.
        row = i * tile_n + lax.broadcasted_iota(jnp.int32, (tile_n, 1), 0)
        hm = jnp.where(row < n_valid, h, 0.0)

        # Sufficient statistics via VPU adds + XLU sublane reduce; keeps the
        # MXU / vector-extended issue slot free for the layer-1 matmul.
        sum_ref[...] += jnp.sum(hm, axis=0, keepdims=True)
        sumsq_ref[...] += jnp.sum(hm * hm, axis=0, keepdims=True)

        @pl.when(i == pl.num_programs(0) - 1)
        def _finalize():
            inv_n = jnp.float32(1.0 / n_valid)
            mean = sum_ref[...] * inv_n
            # Clamp: E[h^2] - E[h]^2 can go slightly negative (cancellation).
            var = jnp.maximum(sumsq_ref[...] * inv_n - mean * mean, 0.0)
            rstd = lax.rsqrt(var + jnp.float32(eps))          # EUP rsqrt
            scale = gamma_ref[...] * rstd
            ss_ref[0:1, :] = scale
            ss_ref[1:2, :] = beta_ref[...] - mean * scale

    return kernel


def _project_kernel(x_ref, w1_ref, ss_ref, w2_ref, b2_ref, o_ref):
    """h = x@W1; hn = h*scale + shift (folded BN affine); ReLU; hn@W2 + b2."""
    h = jnp.dot(x_ref[...].astype(jnp.bfloat16), w1_ref[...],
                preferred_element_type=jnp.float32)
    hn = jnp.maximum(h * ss_ref[0:1, :] + ss_ref[1:2, :], 0.0)   # BN affine + ReLU
    out = jnp.dot(hn.astype(jnp.bfloat16), w2_ref[...],
                  preferred_element_type=jnp.float32) + b2_ref[...]
    o_ref[...] = out.astype(o_ref.dtype)                          # lane-dense vst


def _run(x_p, w1_bf, g_f, bt_f, w2_bf, b2_f, *, n, tile_n, c_pad, vmem_limit,
         weights_buffered):
    n_pad, nfeat = x_p.shape
    nhid = w1_bf.shape[1]
    n_tiles = n_pad // tile_n

    if weights_buffered:
        # Constant-index (VMEM-resident) operands: a single buffer halves their
        # VMEM footprint -- they never change block index.
        const = lambda shape: pl.BlockSpec(shape, lambda i: (0, 0),
                                           pipeline_mode=pl.Buffered(1))
    else:
        const = lambda shape: pl.BlockSpec(shape, lambda i: (0, 0))
    row = lambda shape: pl.BlockSpec(shape, lambda i: (i, 0))

    # --- Kernel A: BN batch statistics -> folded affine (scale, shift). ---
    stats_cost = pl.CostEstimate(
        flops=2 * n_pad * nfeat * nhid + 4 * n_pad * nhid,
        transcendentals=nhid,
        bytes_accessed=(x_p.size * 4 + w1_bf.size * 2
                        + (g_f.size + bt_f.size + 2 * nhid) * 4))
    scale_shift = pl.pallas_call(
        _stats_kernel(tile_n, n, 1e-5),
        out_shape=jax.ShapeDtypeStruct((2, nhid), jnp.float32),
        grid_spec=pltpu.PrefetchScalarGridSpec(
            num_scalar_prefetch=0,
            grid=(n_tiles,),
            in_specs=[row((tile_n, nfeat)),      # x tile (f32, cast in-kernel)
                      const((nfeat, nhid)),      # W1 (bf16)
                      const((1, nhid)),          # gamma
                      const((1, nhid))],         # beta
            out_specs=pl.BlockSpec((2, nhid), lambda i: (0, 0)),
            scratch_shapes=[pltpu.VMEM((1, nhid), jnp.float32),   # sum(h)
                            pltpu.VMEM((1, nhid), jnp.float32)],  # sum(h*h)
        ),
        compiler_params=pltpu.CompilerParams(
            dimension_semantics=("arbitrary",),   # reduction over row tiles
            vmem_limit_bytes=vmem_limit),
        cost_estimate=stats_cost,
    )(x_p, w1_bf, g_f, bt_f)

    # --- Kernel B: normalize (folded affine) + ReLU + second matmul. ---
    proj_cost = pl.CostEstimate(
        flops=2 * n_pad * nhid * (nfeat + c_pad) + 3 * n_pad * nhid,
        transcendentals=0,
        bytes_accessed=(x_p.size * 4 + w1_bf.size * 2 + w2_bf.size * 2
                        + (2 * nhid + b2_f.size) * 4 + n_pad * c_pad * 4))
    out_full = pl.pallas_call(
        _project_kernel,
        out_shape=jax.ShapeDtypeStruct((n_pad, c_pad), jnp.float32),
        grid_spec=pltpu.PrefetchScalarGridSpec(
            num_scalar_prefetch=0,
            grid=(n_tiles,),
            in_specs=[row((tile_n, nfeat)),      # x tile
                      const((nfeat, nhid)),      # W1
                      const((2, nhid)),          # [scale; shift]
                      const((nhid, c_pad)),      # W2 (lane-padded)
                      const((1, c_pad))],        # b2 (lane-padded)
            out_specs=row((tile_n, c_pad)),
        ),
        compiler_params=pltpu.CompilerParams(
            dimension_semantics=("parallel",),    # independent row tiles (v7x)
            vmem_limit_bytes=vmem_limit),
        cost_estimate=proj_cost,
    )(x_p, w1_bf, scale_shift, w2_bf, b2_f)
    return out_full


def mlp_forward(x, w1, b1, gamma, beta, w2, b2, *, tile_n=None):
    """Fused Linear -> BatchNorm1d(train) -> ReLU -> Linear.

    x: [N, nfeat] f32.  Weights pre-transposed: w1 [nfeat, nhid],
    w2 [nhid, nclass]; b1/gamma/beta are [1, nhid], b2 is [1, nclass].
    Returns [N, nclass] f32.  b1 is accepted for API parity but unused: a bias
    immediately before training-mode BatchNorm cancels exactly.
    """
    del b1
    n, nfeat = x.shape
    nhid = w1.shape[1]
    nclass = w2.shape[1]

    c_pad = _round_up(max(nclass, 128), 128)   # lane-dense output slab
    vmem_limit = _vmem_budget_bytes()

    # Row tile: keep last-tile padding small, then shrink to fit the budget.
    if tile_n is None:
        target = 1024 if vmem_limit >= 64 * 1024 * 1024 else 512
        tile_n = _round_up(_cdiv(n, _cdiv(n, target)), 16)
    tile_n = max(16, min(_round_up(tile_n, 16), _round_up(n, 16)))

    def _fits(t):
        resident = 2 * 2 * (nfeat * nhid + nhid * c_pad)        # bf16 weights (2 bufs)
        resident += 2 * 4 * (4 * nhid + c_pad)                  # f32 params
        stream = 2 * t * nfeat * 4 + 2 * t * c_pad * 4          # x + out, double-buffered
        scratch = 4 * nhid * 4
        return resident + stream + scratch <= vmem_limit

    while tile_n > 16 and not _fits(tile_n):
        tile_n = max(16, _round_up(tile_n // 2, 16))

    n_pad = _round_up(n, tile_n)
    x_p = jnp.pad(x, ((0, n_pad - n), (0, 0))) if n_pad != n else x

    # bf16 MXU weight operands; BN params / biases stay f32.  x stays f32 and is
    # cast to bf16 inside the kernel.
    w1_bf = w1.astype(jnp.bfloat16)
    w2_bf = jnp.pad(w2, ((0, 0), (0, c_pad - nclass))).astype(jnp.bfloat16)
    b2_f = jnp.pad(b2, ((0, 0), (0, c_pad - nclass))).astype(jnp.float32)
    g_f = gamma.astype(jnp.float32)
    bt_f = beta.astype(jnp.float32)

    kwargs = dict(n=n, tile_n=tile_n, c_pad=c_pad, vmem_limit=vmem_limit)
    try:
        out_full = _run(x_p, w1_bf, g_f, bt_f, w2_bf, b2_f,
                        weights_buffered=True, **kwargs)
        out_full = jax.block_until_ready(out_full)
    except Exception:
        # pl.Buffered(1) on resident weights not accepted by this jax build:
        # fall back to default double-buffering (identical math).
        out_full = _run(x_p, w1_bf, g_f, bt_f, w2_bf, b2_f,
                        weights_buffered=False, **kwargs)
    return out_full[:n, :nclass]


def reference(x, w1, b1, gamma, beta, w2, b2):
    h = x @ w1 + b1
    mean = jnp.mean(h, axis=0, keepdims=True)
    var = jnp.mean((h - mean) ** 2, axis=0, keepdims=True)
    h = gamma * (h - mean) / jnp.sqrt(var + 1e-5) + beta
    h = jnp.maximum(h, 0.0)
    return h @ w2 + b2


if __name__ == "__main__":
    key = jax.random.PRNGKey(0)
    # N deliberately not a tile multiple so padded-row masking is exercised.
    N, NFEAT, NHID, NCLASS = 60, 32, 32, 8

    ks = jax.random.split(key, 6)
    x = jax.random.normal(ks[0], (N, NFEAT), dtype=jnp.float32)

    # PyTorch shapes are W1 [nhid, nfeat], W2 [nclass, nhid] -- stored here
    # pre-transposed as [in, out].
    w1 = 0.1 * jax.random.normal(ks[1], (NFEAT, NHID), dtype=jnp.float32)
    b1 = 0.1 * jax.random.normal(ks[2], (1, NHID), dtype=jnp.float32)
    w2 = 0.1 * jax.random.normal(ks[3], (NHID, NCLASS), dtype=jnp.float32)
    b2 = 0.1 * jax.random.normal(ks[4], (1, NCLASS), dtype=jnp.float32)
    gamma = jnp.ones((1, NHID), dtype=jnp.float32)   # BN weight init = 1
    beta = jnp.zeros((1, NHID), dtype=jnp.float32)   # BN bias init = 0

    # Small tile so the demo exercises multi-tile stat accumulation + masking
    # (60 rows -> two 32-row tiles, 4 padded rows in the last tile).
    out = mlp_forward(x, w1, b1, gamma, beta, w2, b2, tile_n=32)
    out = jax.block_until_ready(out)

    ref = reference(x, w1, b1, gamma, beta, w2, b2)
    assert out.shape == (N, NCLASS)
    # bf16 MXU operands (f32 accumulation) -> loosened tolerance vs pure f32.
    assert jnp.allclose(out, ref, atol=3e-2, rtol=3e-2), float(
        jnp.max(jnp.abs(out - ref)))

    print("KERNEL_OK")
</pallas_src>

<mosaic_0001>
module attributes {stable_mosaic.version = 11 : i64} {
  func.func @kernel(%arg0: i32, %arg1: memref<32x32xf32, #tpu.memory_space<vmem>>, %arg2: memref<32x32xbf16, #tpu.memory_space<vmem>>, %arg3: memref<1x32xf32, #tpu.memory_space<vmem>>, %arg4: memref<1x32xf32, #tpu.memory_space<vmem>>, %arg5: memref<2x32xf32, #tpu.memory_space<vmem>>, %arg6: memref<1x32xf32, #tpu.memory_space<vmem>>, %arg7: memref<1x32xf32, #tpu.memory_space<vmem>>) attributes {dimension_semantics = [#tpu.dimension_semantics<arbitrary>], iteration_bounds = array<i64: 2>, scalar_prefetch = 0 : i64, scratch_operands = 2 : i64, tpu.core_type = #tpu.core_type<tc>, window_params = [{transform_indices = @transform_0, window_bounds = array<i64: 32, 32>}, {pipeline_mode = #tpu.pipeline_mode<synchronous>, transform_indices = @transform_1, window_bounds = array<i64: 32, 32>}, {pipeline_mode = #tpu.pipeline_mode<synchronous>, transform_indices = @transform_2, window_bounds = array<i64: 1, 32>}, {pipeline_mode = #tpu.pipeline_mode<synchronous>, transform_indices = @transform_3, window_bounds = array<i64: 1, 32>}, {pipeline_mode = #tpu.pipeline_mode<synchronous>, transform_indices = @transform_4, window_bounds = array<i64: 2, 32>}]} {
    %c0_i32 = arith.constant 0 : i32
    %0 = arith.cmpi eq, %arg0, %c0_i32 : i32
    %1 = arith.extui %0 : i1 to i32
    %c0_i32_0 = arith.constant 0 : i32
    %2 = arith.cmpi ne, %1, %c0_i32_0 : i32
    scf.if %2 {
      %cst_16 = arith.constant 0.000000e+00 : f32
      %31 = vector.broadcast %cst_16 : f32 to vector<1x32xf32>
      %c0_17 = arith.constant 0 : index
      %c0_18 = arith.constant 0 : index
      %32 = vector.load %arg6[%c0_17, %c0_18] : memref<1x32xf32, #tpu.memory_space<vmem>>, vector<1x32xf32>
      tpu.vector_store %arg6[%c0_17, %c0_18], %31 {strides = array<i32>} : memref<1x32xf32, #tpu.memory_space<vmem>>, vector<1x32xf32>,
      %cst_19 = arith.constant 0.000000e+00 : f32
      %33 = vector.broadcast %cst_19 : f32 to vector<1x32xf32>
      %c0_20 = arith.constant 0 : index
      %c0_21 = arith.constant 0 : index
      %34 = vector.load %arg7[%c0_20, %c0_21] : memref<1x32xf32, #tpu.memory_space<vmem>>, vector<1x32xf32>
      tpu.vector_store %arg7[%c0_20, %c0_21], %33 {strides = array<i32>} : memref<1x32xf32, #tpu.memory_space<vmem>>, vector<1x32xf32>,
    } else {
    }
    %c0 = arith.constant 0 : index
    %c0_1 = arith.constant 0 : index
    %3 = vector.load %arg1[%c0, %c0_1] : memref<32x32xf32, #tpu.memory_space<vmem>>, vector<32x32xf32>
    %4 = arith.truncf %3 : vector<32x32xf32> to vector<32x32xbf16>
    %c0_2 = arith.constant 0 : index
    %c0_3 = arith.constant 0 : index
    %5 = vector.load %arg2[%c0_2, %c0_3] : memref<32x32xbf16, #tpu.memory_space<vmem>>, vector<32x32xbf16>
    %cst = arith.constant dense<0.000000e+00> : vector<32x32xf32>
    %6 = tpu.matmul %4, %5, %cst {dimension_numbers = #tpu.dot_dimension_numbers<[1], [0], [0], [1], [0, 0, 1, 1], [], []>} : vector<32x32xbf16>, vector<32x32xbf16>, vector<32x32xf32> -> vector<32x32xf32>
    %c32_i32 = arith.constant 32 : i32
    %7 = arith.muli %arg0, %c32_i32 : i32
    %8 = tpu.iota {dimensions = array<i32: 0>} : vector<32x1xi32>
    %9 = vector.broadcast %7 : i32 to vector<32x1xi32>
    %10 = arith.addi %9, %8 : vector<32x1xi32>
    %c60_i32 = arith.constant 60 : i32
    %11 = vector.broadcast %c60_i32 : i32 to vector<32x1xi32>
    %12 = arith.cmpi slt, %10, %11 : vector<32x1xi32>
    %cst_4 = arith.constant 0.000000e+00 : f32
    %13 = vector.shape_cast %12 : vector<32x1xi1> to vector<32x1xi1>
    %14 = vector.broadcast %13 : vector<32x1xi1> to vector<32x32xi1>
    %15 = vector.broadcast %cst_4 : f32 to vector<32x32xf32>
    %16 = arith.select %14, %6, %15 : vector<32x32xi1>, vector<32x32xf32>
    %c0_5 = arith.constant 0 : index
    %c0_6 = arith.constant 0 : index
    %17 = vector.load %arg6[%c0_5, %c0_6] : memref<1x32xf32, #tpu.memory_space<vmem>>, vector<1x32xf32>
    %cst_7 = arith.constant dense<0.000000e+00> : vector<32xf32>
    %18 = vector.multi_reduction <add>, %16, %cst_7 [0] : vector<32x32xf32> to vector<32xf32>
    %19 = vector.shape_cast %18 : vector<32xf32> to vector<1x32xf32>
    %20 = arith.addf %17, %19 : vector<1x32xf32>
    %c0_8 = arith.constant 0 : index
    %c0_9 = arith.constant 0 : index
    %21 = vector.load %arg6[%c0_8, %c0_9] : memref<1x32xf32, #tpu.memory_space<vmem>>, vector<1x32xf32>
    tpu.vector_store %arg6[%c0_8, %c0_9], %20 {strides = array<i32>} : memref<1x32xf32, #tpu.memory_space<vmem>>, vector<1x32xf32>,
    %c0_10 = arith.constant 0 : index
    %c0_11 = arith.constant 0 : index
    %22 = vector.load %arg7[%c0_10, %c0_11] : memref<1x32xf32, #tpu.memory_space<vmem>>, vector<1x32xf32>
    %23 = arith.mulf %16, %16 : vector<32x32xf32>
    %cst_12 = arith.constant dense<0.000000e+00> : vector<32xf32>
    %24 = vector.multi_reduction <add>, %23, %cst_12 [0] : vector<32x32xf32> to vector<32xf32>
    %25 = vector.shape_cast %24 : vector<32xf32> to vector<1x32xf32>
    %26 = arith.addf %22, %25 : vector<1x32xf32>
    %c0_13 = arith.constant 0 : index
    %c0_14 = arith.constant 0 : index
    %27 = vector.load %arg7[%c0_13, %c0_14] : memref<1x32xf32, #tpu.memory_space<vmem>>, vector<1x32xf32>
    tpu.vector_store %arg7[%c0_13, %c0_14], %26 {strides = array<i32>} : memref<1x32xf32, #tpu.memory_space<vmem>>, vector<1x32xf32>,
    %c1_i32 = arith.constant 1 : i32
    %28 = arith.cmpi eq, %arg0, %c1_i32 : i32
    %29 = arith.extui %28 : i1 to i32
    %c0_i32_15 = arith.constant 0 : i32
    %30 = arith.cmpi ne, %29, %c0_i32_15 : i32
    scf.if %30 {
      %c0_16 = arith.constant 0 : index
      %c0_17 = arith.constant 0 : index
      %31 = vector.load %arg6[%c0_16, %c0_17] : memref<1x32xf32, #tpu.memory_space<vmem>>, vector<1x32xf32>
      %cst_18 = arith.constant 0.0166666675 : f32
      %32 = vector.broadcast %cst_18 : f32 to vector<1x32xf32>
      %33 = arith.mulf %31, %32 : vector<1x32xf32>
      %c0_19 = arith.constant 0 : index
      %c0_20 = arith.constant 0 : index
      %34 = vector.load %arg7[%c0_19, %c0_20] : memref<1x32xf32, #tpu.memory_space<vmem>>, vector<1x32xf32>
      %cst_21 = arith.constant 0.0166666675 : f32
      %35 = vector.broadcast %cst_21 : f32 to vector<1x32xf32>
      %36 = arith.mulf %34, %35 : vector<1x32xf32>
      %37 = arith.mulf %33, %33 : vector<1x32xf32>
      %38 = arith.subf %36, %37 : vector<1x32xf32>
      %cst_22 = arith.constant 0.000000e+00 : f32
      %39 = vector.broadcast %cst_22 : f32 to vector<1x32xf32>
      %40 = arith.maximumf %38, %39 : vector<1x32xf32>
      %cst_23 = arith.constant 9.99999974E-6 : f32
      %41 = vector.broadcast %cst_23 : f32 to vector<1x32xf32>
      %42 = arith.addf %40, %41 : vector<1x32xf32>
      %43 = math.rsqrt %42 : vector<1x32xf32>
      %c0_24 = arith.constant 0 : index
      %c0_25 = arith.constant 0 : index
      %44 = vector.load %arg3[%c0_24, %c0_25] : memref<1x32xf32, #tpu.memory_space<vmem>>, vector<1x32xf32>
      %45 = arith.mulf %44, %43 : vector<1x32xf32>
      %c0_26 = arith.constant 0 : index
      %c0_27 = arith.constant 0 : index
      %46 = vector.load %arg5[%c0_26, %c0_27] : memref<2x32xf32, #tpu.memory_space<vmem>>, vector<1x32xf32>
      tpu.vector_store %arg5[%c0_26, %c0_27], %45 {strides = array<i32>} : memref<2x32xf32, #tpu.memory_space<vmem>>, vector<1x32xf32>,
      %c0_28 = arith.constant 0 : index
      %c0_29 = arith.constant 0 : index
      %47 = vector.load %arg4[%c0_28, %c0_29] : memref<1x32xf32, #tpu.memory_space<vmem>>, vector<1x32xf32>
      %48 = arith.mulf %33, %45 : vector<1x32xf32>
      %49 = arith.subf %47, %48 : vector<1x32xf32>
      %c1 = arith.constant 1 : index
      %c0_30 = arith.constant 0 : index
      %50 = vector.load %arg5[%c1, %c0_30] : memref<2x32xf32, #tpu.memory_space<vmem>>, vector<1x32xf32>
      tpu.vector_store %arg5[%c1, %c0_30], %49 {strides = array<i32>} : memref<2x32xf32, #tpu.memory_space<vmem>>, vector<1x32xf32>,
    } else {
    }
    return
  }
  func.func @transform_0(%arg0: i32) -> (i32, i32) {
    %c0_i32 = arith.constant 0 : i32
    %c0_i32_0 = arith.constant 0 : i32
    return %arg0, %c0_i32 : i32, i32
  }
  func.func @transform_1(%arg0: i32) -> (i32, i32) {
    %c0_i32 = arith.constant 0 : i32
    %c0_i32_0 = arith.constant 0 : i32
    %c0_i32_1 = arith.constant 0 : i32
    return %c0_i32, %c0_i32_0 : i32, i32
  }
  func.func @transform_2(%arg0: i32) -> (i32, i32) {
    %c0_i32 = arith.constant 0 : i32
    %c0_i32_0 = arith.constant 0 : i32
    %c0_i32_1 = arith.constant 0 : i32
    return %c0_i32, %c0_i32_0 : i32, i32
  }
  func.func @transform_3(%arg0: i32) -> (i32, i32) {
    %c0_i32 = arith.constant 0 : i32
    %c0_i32_0 = arith.constant 0 : i32
    %c0_i32_1 = arith.constant 0 : i32
    return %c0_i32, %c0_i32_0 : i32, i32
  }
  func.func @transform_4(%arg0: i32) -> (i32, i32) {
    %c0_i32 = arith.constant 0 : i32
    %c0_i32_0 = arith.constant 0 : i32
    %c0_i32_1 = arith.constant 0 : i32
    return %c0_i32, %c0_i32_0 : i32, i32
  }
}

module attributes {stable_mosaic.version = 11 : i64} {
  func.func @kernel(%arg0: i32, %arg1: memref<32x32xf32, #tpu.memory_space<vmem>>, %arg2: memref<32x32xbf16, #tpu.memory_space<vmem>>, %arg3: memref<1x32xf32, #tpu.memory_space<vmem>>, %arg4: memref<1x32xf32, #tpu.memory_space<vmem>>, %arg5: memref<2x32xf32, #tpu.memory_space<vmem>>, %arg6: memref<1x32xf32, #tpu.memory_space<vmem>>, %arg7: memref<1x32xf32, #tpu.memory_space<vmem>>) attributes {dimension_semantics = [#tpu.dimension_semantics<arbitrary>], iteration_bounds = array<i64: 2>, scalar_prefetch = 0 : i64, scratch_operands = 2 : i64, tpu.core_type = #tpu.core_type<tc>, window_params = [{transform_indices = @transform_0, window_bounds = array<i64: 32, 32>}, {pipeline_mode = #tpu.pipeline_mode<synchronous>, transform_indices = @transform_1, window_bounds = array<i64: 32, 32>}, {pipeline_mode = #tpu.pipeline_mode<synchronous>, transform_indices = @transform_2, window_bounds = array<i64: 1, 32>}, {pipeline_mode = #tpu.pipeline_mode<synchronous>, transform_indices = @transform_3, window_bounds = array<i64: 1, 32>}, {pipeline_mode = #tpu.pipeline_mode<synchronous>, transform_indices = @transform_4, window_bounds = array<i64: 2, 32>}]} {
    %c0_i32 = arith.constant 0 : i32
    %0 = arith.cmpi eq, %arg0, %c0_i32 : i32
    %1 = arith.extui %0 : i1 to i32
    %c0_i32_0 = arith.constant 0 : i32
    %2 = arith.cmpi ne, %1, %c0_i32_0 : i32
    scf.if %2 {
      %cst_16 = arith.constant 0.000000e+00 : f32
      %31 = vector.broadcast %cst_16 : f32 to vector<1x32xf32>
      %c0_17 = arith.constant 0 : index
      %c0_18 = arith.constant 0 : index
      %32 = vector.load %arg6[%c0_17, %c0_18] : memref<1x32xf32, #tpu.memory_space<vmem>>, vector<1x32xf32>
      tpu.vector_store %arg6[%c0_17, %c0_18], %31 {strides = array<i32>} : memref<1x32xf32, #tpu.memory_space<vmem>>, vector<1x32xf32>,
      %cst_19 = arith.constant 0.000000e+00 : f32
      %33 = vector.broadcast %cst_19 : f32 to vector<1x32xf32>
      %c0_20 = arith.constant 0 : index
      %c0_21 = arith.constant 0 : index
      %34 = vector.load %arg7[%c0_20, %c0_21] : memref<1x32xf32, #tpu.memory_space<vmem>>, vector<1x32xf32>
      tpu.vector_store %arg7[%c0_20, %c0_21], %33 {strides = array<i32>} : memref<1x32xf32, #tpu.memory_space<vmem>>, vector<1x32xf32>,
    } else {
    }
    %c0 = arith.constant 0 : index
    %c0_1 = arith.constant 0 : index
    %3 = vector.load %arg1[%c0, %c0_1] : memref<32x32xf32, #tpu.memory_space<vmem>>, vector<32x32xf32>
    %4 = arith.truncf %3 : vector<32x32xf32> to vector<32x32xbf16>
    %c0_2 = arith.constant 0 : index
    %c0_3 = arith.constant 0 : index
    %5 = vector.load %arg2[%c0_2, %c0_3] : memref<32x32xbf16, #tpu.memory_space<vmem>>, vector<32x32xbf16>
    %cst = arith.constant dense<0.000000e+00> : vector<32x32xf32>
    %6 = tpu.matmul %4, %5, %cst {dimension_numbers = #tpu.dot_dimension_numbers<[1], [0], [0], [1], [0, 0, 1, 1], [], []>} : vector<32x32xbf16>, vector<32x32xbf16>, vector<32x32xf32> -> vector<32x32xf32>
    %c32_i32 = arith.constant 32 : i32
    %7 = arith.muli %arg0, %c32_i32 : i32
    %8 = tpu.iota {dimensions = array<i32: 0>} : vector<32x1xi32>
    %9 = vector.broadcast %7 : i32 to vector<32x1xi32>
    %10 = arith.addi %9, %8 : vector<32x1xi32>
    %c60_i32 = arith.constant 60 : i32
    %11 = vector.broadcast %c60_i32 : i32 to vector<32x1xi32>
    %12 = arith.cmpi slt, %10, %11 : vector<32x1xi32>
    %cst_4 = arith.constant 0.000000e+00 : f32
    %13 = vector.shape_cast %12 : vector<32x1xi1> to vector<32x1xi1>
    %14 = vector.broadcast %13 : vector<32x1xi1> to vector<32x32xi1>
    %15 = vector.broadcast %cst_4 : f32 to vector<32x32xf32>
    %16 = arith.select %14, %6, %15 : vector<32x32xi1>, vector<32x32xf32>
    %c0_5 = arith.constant 0 : index
    %c0_6 = arith.constant 0 : index
    %17 = vector.load %arg6[%c0_5, %c0_6] : memref<1x32xf32, #tpu.memory_space<vmem>>, vector<1x32xf32>
    %cst_7 = arith.constant dense<0.000000e+00> : vector<32xf32>
    %18 = vector.multi_reduction <add>, %16, %cst_7 [0] : vector<32x32xf32> to vector<32xf32>
    %19 = vector.shape_cast %18 : vector<32xf32> to vector<1x32xf32>
    %20 = arith.addf %17, %19 : vector<1x32xf32>
    %c0_8 = arith.constant 0 : index
    %c0_9 = arith.constant 0 : index
    %21 = vector.load %arg6[%c0_8, %c0_9] : memref<1x32xf32, #tpu.memory_space<vmem>>, vector<1x32xf32>
    tpu.vector_store %arg6[%c0_8, %c0_9], %20 {strides = array<i32>} : memref<1x32xf32, #tpu.memory_space<vmem>>, vector<1x32xf32>,
    %c0_10 = arith.constant 0 : index
    %c0_11 = arith.constant 0 : index
    %22 = vector.load %arg7[%c0_10, %c0_11] : memref<1x32xf32, #tpu.memory_space<vmem>>, vector<1x32xf32>
    %23 = arith.mulf %16, %16 : vector<32x32xf32>
    %cst_12 = arith.constant dense<0.000000e+00> : vector<32xf32>
    %24 = vector.multi_reduction <add>, %23, %cst_12 [0] : vector<32x32xf32> to vector<32xf32>
    %25 = vector.shape_cast %24 : vector<32xf32> to vector<1x32xf32>
    %26 = arith.addf %22, %25 : vector<1x32xf32>
    %c0_13 = arith.constant 0 : index
    %c0_14 = arith.constant 0 : index
    %27 = vector.load %arg7[%c0_13, %c0_14] : memref<1x32xf32, #tpu.memory_space<vmem>>, vector<1x32xf32>
    tpu.vector_store %arg7[%c0_13, %c0_14], %26 {strides = array<i32>} : memref<1x32xf32, #tpu.memory_space<vmem>>, vector<1x32xf32>,
    %c1_i32 = arith.constant 1 : i32
    %28 = arith.cmpi eq, %arg0, %c1_i32 : i32
    %29 = arith.extui %28 : i1 to i32
    %c0_i32_15 = arith.constant 0 : i32
    %30 = arith.cmpi ne, %29, %c0_i32_15 : i32
    scf.if %30 {
      %c0_16 = arith.constant 0 : index
      %c0_17 = arith.constant 0 : index
      %31 = vector.load %arg6[%c0_16, %c0_17] : memref<1x32xf32, #tpu.memory_space<vmem>>, vector<1x32xf32>
      %cst_18 = arith.constant 0.0166666675 : f32
      %32 = vector.broadcast %cst_18 : f32 to vector<1x32xf32>
      %33 = arith.mulf %31, %32 : vector<1x32xf32>
      %c0_19 = arith.constant 0 : index
      %c0_20 = arith.constant 0 : index
      %34 = vector.load %arg7[%c0_19, %c0_20] : memref<1x32xf32, #tpu.memory_space<vmem>>, vector<1x32xf32>
      %cst_21 = arith.constant 0.0166666675 : f32
      %35 = vector.broadcast %cst_21 : f32 to vector<1x32xf32>
      %36 = arith.mulf %34, %35 : vector<1x32xf32>
      %37 = arith.mulf %33, %33 : vector<1x32xf32>
      %38 = arith.subf %36, %37 : vector<1x32xf32>
      %cst_22 = arith.constant 0.000000e+00 : f32
      %39 = vector.broadcast %cst_22 : f32 to vector<1x32xf32>
      %40 = arith.maximumf %38, %39 : vector<1x32xf32>
      %cst_23 = arith.constant 9.99999974E-6 : f32
      %41 = vector.broadcast %cst_23 : f32 to vector<1x32xf32>
      %42 = arith.addf %40, %41 : vector<1x32xf32>
      %43 = math.rsqrt %42 : vector<1x32xf32>
      %c0_24 = arith.constant 0 : index
      %c0_25 = arith.constant 0 : index
      %44 = vector.load %arg3[%c0_24, %c0_25] : memref<1x32xf32, #tpu.memory_space<vmem>>, vector<1x32xf32>
      %45 = arith.mulf %44, %43 : vector<1x32xf32>
      %c0_26 = arith.constant 0 : index
      %c0_27 = arith.constant 0 : index
      %46 = vector.load %arg5[%c0_26, %c0_27] : memref<2x32xf32, #tpu.memory_space<vmem>>, vector<1x32xf32>
      tpu.vector_store %arg5[%c0_26, %c0_27], %45 {strides = array<i32>} : memref<2x32xf32, #tpu.memory_space<vmem>>, vector<1x32xf32>,
      %c0_28 = arith.constant 0 : index
      %c0_29 = arith.constant 0 : index
      %47 = vector.load %arg4[%c0_28, %c0_29] : memref<1x32xf32, #tpu.memory_space<vmem>>, vector<1x32xf32>
      %48 = arith.mulf %33, %45 : vector<1x32xf32>
      %49 = arith.subf %47, %48 : vector<1x32xf32>
      %c1 = arith.constant 1 : index
      %c0_30 = arith.constant 0 : index
      %50 = vector.load %arg5[%c1, %c0_30] : memref<2x32xf32, #tpu.memory_space<vmem>>, vector<1x32xf32>
      tpu.vector_store %arg5[%c1, %c0_30], %49 {strides = array<i32>} : memref<2x32xf32, #tpu.memory_space<vmem>>, vector<1x32xf32>,
    } else {
    }
    return
  }
  func.func @transform_0(%arg0: i32) -> (i32, i32) {
    %c0_i32 = arith.constant 0 : i32
    %c0_i32_0 = arith.constant 0 : i32
    return %arg0, %c0_i32 : i32, i32
  }
  func.func @transform_1(%arg0: i32) -> (i32, i32) {
    %c0_i32 = arith.constant 0 : i32
    %c0_i32_0 = arith.constant 0 : i32
    %c0_i32_1 = arith.constant 0 : i32
    return %c0_i32, %c0_i32_0 : i32, i32
  }
  func.func @transform_2(%arg0: i32) -> (i32, i32) {
    %c0_i32 = arith.constant 0 : i32
    %c0_i32_0 = arith.constant 0 : i32
    %c0_i32_1 = arith.constant 0 : i32
    return %c0_i32, %c0_i32_0 : i32, i32
  }
  func.func @transform_3(%arg0: i32) -> (i32, i32) {
    %c0_i32 = arith.constant 0 : i32
    %c0_i32_0 = arith.constant 0 : i32
    %c0_i32_1 = arith.constant 0 : i32
    return %c0_i32, %c0_i32_0 : i32, i32
  }
  func.func @transform_4(%arg0: i32) -> (i32, i32) {
    %c0_i32 = arith.constant 0 : i32
    %c0_i32_0 = arith.constant 0 : i32
    %c0_i32_1 = arith.constant 0 : i32
    return %c0_i32, %c0_i32_0 : i32, i32
  }
}

</mosaic_0001>

<llo_original>
// kernel: tpu_custom_call.1
$region0: #{tpu_custom_call.1}
  #allocation0 [shape = 'u32[]', space=smem, size = 0x4, offset = 0x4, fixed_abs, tag = 'smem constant byte address 0x4 - core index']
  #allocation1 [shape = 'u32[144,128]{1,0:T(1,128)}', space=vmem, size = 0x12000, scoped, tag = 'internal scratch']
  #allocation2 [shape = 'f32[1,32]{1,0:T(1,128)}', space=vmem, size = 0x200, scoped, tag = 'scratch operand']
  #allocation3 [shape = 'f32[1,32]{1,0:T(1,128)}', space=vmem, size = 0x200, scoped, tag = 'scratch operand']
  %s0 = inlined_call_operand.vmem [shape: f32[64,32], index: 0, kind: input, shape index: {}]
  %s1 = inlined_call_operand.vmem [shape: bf16[32,32], index: 1, kind: input, shape index: {}]
  %s2 = inlined_call_operand.vmem [shape: f32[1,32], index: 2, kind: input, shape index: {}]
  %s3 = inlined_call_operand.vmem [shape: f32[1,32], index: 3, kind: input, shape index: {}]
  %s4 = inlined_call_operand.hbm [shape: f32[2,32], index: 4, kind: output, shape index: {}]
  %s5 = sld [smem:[#allocation0]]
  $region57: #{tpu_custom_call.1} parent=0
    _
  %s7 = ssub.s32 1, %s5
  %s8 = scalar_select 0, %s7, %s5
  $region1: #{tpu_custom_call.1} parent=0
    #allocation4 [shape = 'u8[1024]{0}', space=vmem, size = 0x400, scoped, tag = 'output window, operand 0, single buffered']
    #allocation5 [shape = 's32[2]{0}', space=sflag, size = 0x8, scoped, tag = 'scoped memory for tpu_custom_call.1']
    %9 = vsyncpa [#allocation5], 0
    loop: start=0, step=1, limit=4
    $region2: #{tpu_custom_call.1} parent=1 // loop_pre_header
      _
    $region3: #{tpu_custom_call.1} parent=1 // loop_header
      %s11 = sphi 0, %s15
      %p12 = scmp.ge.s32.totalorder %s11, 4
      %s21 = sphi 0, %s23
      %s24 = sphi 0, %s21
      %s25 = sphi 0, %s24
      %s41 = sphi 0, %s25
      %s45 = sphi 0, %s45
      %s47 = sphi 0, %s45
      %s48 = sphi 0, %s47
      %s62 = sphi 0, %s48
      %s66 = sphi 0, %s66
      %s68 = sphi 0, %s66
      %s69 = sphi 0, %s68
      %s83 = sphi 0, %s69
      %s87 = sphi 0, %s87
      %s89 = sphi 0, %s87
      %s90 = sphi 0, %s89
      %s104 = sphi 0, %s90
      %s108 = sphi 0, %s108
      %s110 = sphi 0, %s108
      %s111 = sphi 0, %s110
      %s125 = sphi 0, %s111
    $region4: #{tpu_custom_call.1} parent=1 // loop_header_branch
      %14 = sbr.rel (%p12) target = $region8
    $region5: #{tpu_custom_call.1} parent=1 // loop_body
      %s16 = ssub.s32 %s11, 1
      %s17 = ssub.s32 %s11, 2
      %s18 = sadd.s32 %s11, 1
      %s19 = ssub.s32 %s11, %s18
      %p20 = scmp.eq.s32.totalorder %s19, 0
      %s22 = sadd.s32 %s21, 1
      %s23 = scalar_select %p20, %s21, %s22
      %p26 = pneg %p20
      %p27 = scmp.eq.s32.totalorder %s11, 1
      %p28 = por %p26, %p27
      %p29 = scmp.ne.s32.totalorder %s21, %s24
      %p30 = scmp.eq.s32.totalorder %s11, 0
      %p31 = por %p29, %p30
      %p32 = scmp.ne.s32.totalorder %s21, %s24
      %p33 = scmp.eq.s32.totalorder %s16, 1
      %p34 = por %p32, %p33
      %p35 = scmp.ne.s32.totalorder %s24, %s25
      %p36 = scmp.eq.s32.totalorder %s16, 0
      %p37 = por %p35, %p36
      %p38 = scmp.ne.s32.totalorder %s24, %s25
      %p39 = scmp.eq.s32.totalorder %s17, 1
      %p40 = por %p38, %p39
      %p42 = scmp.ne.s32.totalorder %s25, %s41
      %p43 = scmp.eq.s32.totalorder %s17, 0
      %p44 = por %p42, %p43
      %s46 = sadd.s32 %s45, 1
      %p49 = scmp.eq.s32.totalorder %s11, 1
      %p50 = scmp.ne.s32.totalorder %s45, %s47
      %p51 = scmp.eq.s32.totalorder %s11, 0
      %p52 = por %p50, %p51
      %p53 = scmp.ne.s32.totalorder %s45, %s47
      %p54 = scmp.eq.s32.totalorder %s16, 1
      %p55 = por %p53, %p54
      %p56 = scmp.ne.s32.totalorder %s47, %s48
      %p57 = scmp.eq.s32.totalorder %s16, 0
      %p58 = por %p56, %p57
      %p59 = scmp.ne.s32.totalorder %s47, %s48
      %p60 = scmp.eq.s32.totalorder %s17, 1
      %p61 = por %p59, %p60
      %p63 = scmp.ne.s32.totalorder %s48, %s62
      %p64 = scmp.eq.s32.totalorder %s17, 0
      %p65 = por %p63, %p64
      %s67 = sadd.s32 %s66, 1
      %p70 = scmp.eq.s32.totalorder %s11, 1
      %p71 = scmp.ne.s32.totalorder %s66, %s68
      %p72 = scmp.eq.s32.totalorder %s11, 0
      %p73 = por %p71, %p72
      %p74 = scmp.ne.s32.totalorder %s66, %s68
      %p75 = scmp.eq.s32.totalorder %s16, 1
      %p76 = por %p74, %p75
      %p77 = scmp.ne.s32.totalorder %s68, %s69
      %p78 = scmp.eq.s32.totalorder %s16, 0
      %p79 = por %p77, %p78
      %p80 = scmp.ne.s32.totalorder %s68, %s69
      %p81 = scmp.eq.s32.totalorder %s17, 1
      %p82 = por %p80, %p81
      %p84 = scmp.ne.s32.totalorder %s69, %s83
      %p85 = scmp.eq.s32.totalorder %s17, 0
      %p86 = por %p84, %p85
      %s88 = sadd.s32 %s87, 1
      %p91 = scmp.eq.s32.totalorder %s11, 1
      %p92 = scmp.ne.s32.totalorder %s87, %s89
      %p93 = scmp.eq.s32.totalorder %s11, 0
      %p94 = por %p92, %p93
      %p95 = scmp.ne.s32.totalorder %s87, %s89
      %p96 = scmp.eq.s32.totalorder %s16, 1
      %p97 = por %p95, %p96
      %p98 = scmp.ne.s32.totalorder %s89, %s90
      %p99 = scmp.eq.s32.totalorder %s16, 0
      %p100 = por %p98, %p99
      %p101 = scmp.ne.s32.totalorder %s89, %s90
      %p102 = scmp.eq.s32.totalorder %s17, 1
      %p103 = por %p101, %p102
      %p105 = scmp.ne.s32.totalorder %s90, %s104
      %p106 = scmp.eq.s32.totalorder %s17, 0
      %p107 = por %p105, %p106
      %s109 = sadd.s32 %s108, 1
      %p112 = scmp.eq.s32.totalorder %s11, 1
      %p113 = scmp.ne.s32.totalorder %s108, %s110
      %p114 = scmp.eq.s32.totalorder %s11, 0
      %p115 = por %p113, %p114
      %p116 = scmp.ne.s32.totalorder %s108, %s110
      %p117 = scmp.eq.s32.totalorder %s16, 1
      %p118 = por %p116, %p117
      %p119 = scmp.ne.s32.totalorder %s110, %s111
      %p120 = scmp.eq.s32.totalorder %s16, 0
      %p121 = por %p119, %p120
      %p122 = scmp.ne.s32.totalorder %s110, %s111
      %p123 = scmp.eq.s32.totalorder %s17, 1
      %p124 = por %p122, %p123
      %p126 = scmp.ne.s32.totalorder %s111, %s125
      %p127 = scmp.eq.s32.totalorder %s17, 0
      %p128 = por %p126, %p127
      %p129 = scmp.le.s32.totalorder 1, %s11
      %p130 = scmp.lt.s32.totalorder %s11, 3
      %p131 = pnand %p129, %p130
      %p132 = pneg %p131
      // Predicated region
      $region9: #{tpu_custom_call.1} parent=5 // pred_check
        _
      $region10: #{tpu_custom_call.1} parent=5 // pred_check_branch
        %134 = sbr.rel (%p131) target = $region12
      $region11: #{tpu_custom_call.1} parent=5 // pred_region
        %s135 = ssub.s32 %s11, 1
        // Predicated region
        $region13: #{tpu_custom_call.1} parent=11 // pred_check
          %p136 = pneg %p58
        $region14: #{tpu_custom_call.1} parent=11 // pred_check_branch
          %138 = sbr.rel (%p136) target = $region16
        $region15: #{tpu_custom_call.1} parent=11 // pred_region
          _
        $region16: #{tpu_custom_call.1} parent=11 // pred_fallthru
          _
        // Predicated region
        $region17: #{tpu_custom_call.1} parent=11 // pred_check
          %p139 = pneg %p79
        $region18: #{tpu_custom_call.1} parent=11 // pred_check_branch
          %141 = sbr.rel (%p139) target = $region20
        $region19: #{tpu_custom_call.1} parent=11 // pred_region
          _
        $region20: #{tpu_custom_call.1} parent=11 // pred_fallthru
          _
        // Predicated region
        $region21: #{tpu_custom_call.1} parent=11 // pred_check
          %p142 = pneg %p100
        $region22: #{tpu_custom_call.1} parent=11 // pred_check_branch
          %144 = sbr.rel (%p142) target = $region24
        $region23: #{tpu_custom_call.1} parent=11 // pred_region
          _
        $region24: #{tpu_custom_call.1} parent=11 // pred_fallthru
          _
      $region12: #{tpu_custom_call.1} parent=5 // pred_fallthru
        _
      %p145 = scmp.lt.s32.totalorder %s11, 2
      // Predicated region
      $region25: #{tpu_custom_call.1} parent=5 // pred_check
        %p146 = pneg %p145
      $region26: #{tpu_custom_call.1} parent=5 // pred_check_branch
        %148 = sbr.rel (%p146) target = $region28
      $region27: #{tpu_custom_call.1} parent=5 // pred_region
        // Predicated region
        $region29: #{tpu_custom_call.1} parent=27 // pred_check
          %p149 = pneg %p31
        $region30: #{tpu_custom_call.1} parent=27 // pred_check_branch
          %151 = sbr.rel (%p149) target = $region32
        $region31: #{tpu_custom_call.1} parent=27 // pred_region
          %s152 = smul.u32 4, %s11
          %p153 = scmp.lt.s32.totalorder %s152, 7
          %s154 = scalar_select %p153, %s152, 7
          %s155 = smul.addr %s154, 8
          %s156 = scalar_lea.vmem %s0, %s155
          %s157 = smul.u32 4, %s11
        $region32: #{tpu_custom_call.1} parent=27 // pred_fallthru
          _
      $region28: #{tpu_custom_call.1} parent=5 // pred_fallthru
        _
      %p158 = scmp.le.s32.totalorder 1, %s11
      %p159 = scmp.lt.s32.totalorder %s11, 3
      %p160 = pnand %p158, %p159
      %p161 = pneg %p160
      // Predicated region
      $region33: #{tpu_custom_call.1} parent=5 // pred_check
        _
      $region34: #{tpu_custom_call.1} parent=5 // pred_check_branch
        %163 = sbr.rel (%p160) target = $region36
      $region35: #{tpu_custom_call.1} parent=5 // pred_region
        %s164 = ssub.s32 %s11, 1
        %s165 = smul.u32 4, %s16
        %p166 = scmp.lt.s32.totalorder %s165, 7
        %s167 = scalar_select %p166, %s165, 7
        %s168 = smul.addr %s167, 8
        %s169 = scalar_lea.vmem %s0, %s168
        %p170 = pneg %p37
        %p171 = pneg %p34
        %p172 = pneg %p58
        %p173 = pneg %p55
        %p174 = pneg %p79
        %p175 = pneg %p76
        %p176 = pneg %p100
        %p177 = pneg %p97
        %p178 = pneg %p121
        %p179 = pneg %p118
        %s180 = smul.u32 4, %s16
        %p181 = scmp.lt.s32.totalorder %s180, 7
        %s182 = scalar_select %p181, %s180, 7
        %s183 = smul.addr %s182, 8
        %s184 = scalar_lea.vmem %s0, %s183
        %s185 = smul.u32 4, %s16
        %p187 = scmp.eq.s32.totalorder %s16, 0
        // Predicated region
        $region37: #{tpu_custom_call.1} parent=35 // pred_check
          %p188 = pneg %p187
        $region38: #{tpu_custom_call.1} parent=35 // pred_check_branch
          %190 = sbr.rel (%p188) target = $region40
        $region39: #{tpu_custom_call.1} parent=35 // pred_region
          %vm191 = vcmask 253952
          %192 = vst.msk [vmem:[#allocation2] sm:$0x1] %vm191, 0.0
          %193 = vst.msk [vmem:[#allocation3] sm:$0x1] %vm191, 0.0
        $region40: #{tpu_custom_call.1} parent=35 // pred_fallthru
          _
        %v194 = vld [vmem:[%s184] sm:$0xff]
        %v195 = vld [vmem:[%s184 + $0x8] sm:$0xff]
        %v196 = vld [vmem:[%s184 + $0x10] sm:$0xff]
        %v197 = vld [vmem:[%s184 + $0x18] sm:$0xff]
        %v198 = vpack.c.bf16 %v195, %v194
        %v199 = vpack.c.bf16 %v197, %v196
        %v200 = vld [vmem:[%s1] sm:$0xf]
        %v201 = vld [vmem:[%s1 + $0x4] sm:$0xf]
        %v202 = vld [vmem:[%s1 + $0x8] sm:$0xf]
        %v203 = vld [vmem:[%s1 + $0xc] sm:$0xf]
        %v208 = vunpack.c.l.b16 %v200
        %v209 = vunpack.c.l.b16 %v201
        %v210 = vunpack.c.l.b16 %v202
        %v211 = vunpack.c.l.b16 %v203
        %v212 = vpack.c.b16 %v209, %v208
        %v213 = vpack.c.b16 %v211, %v210
        %vm216 = vcmask 261120
        %v218 = vsel %vm216, %v198, 0
        %v221 = vsel %vm216, %v199, 0
        %223 = vmatprep.subr.bf16.mxu0 0
        %224 = vmatpush1.bf16.msra.mxu0 %v212
        %225 = vmatprep.subr.bf16.mxu0 0
        %226 = vmatpush1.bf16.msra.mxu0 %v213
        %227 = vmatprep.subr.bf16.mxu0 0
        %228 = vmatpush1.bf16.msra.mxu0 0
        %229 = vmatprep.subr.bf16.mxu0 0
        %230 = vmatpush1.bf16.msra.mxu0 0
        %231 = vmatprep.subr.bf16.mxu0 0
        %232 = vmatpush1.bf16.msra.mxu0 0
        %233 = vmatprep.subr.bf16.mxu0 0
        %234 = vmatpush1.bf16.msra.mxu0 0
        %235 = vmatprep.subr.bf16.mxu0 0
        %236 = vmatpush1.bf16.msra.mxu0 0
        %237 = vmatprep.subr.bf16.mxu0 0
        %238 = vmatpush1.bf16.msra.mxu0 0
        %239 = vmatprep.subr.bf16.mxu0 0
        %240 = vmatpush1.bf16.msra.mxu0 0
        %241 = vmatprep.subr.bf16.mxu0 0
        %242 = vmatpush1.bf16.msra.mxu0 0
        %243 = vmatprep.subr.bf16.mxu0 0
        %244 = vmatpush1.bf16.msra.mxu0 0
        %245 = vmatprep.subr.bf16.mxu0 0
        %246 = vmatpush1.bf16.msra.mxu0 0
        %247 = vmatprep.subr.bf16.mxu0 0
        %248 = vmatpush1.bf16.msra.mxu0 0
        %249 = vmatprep.subr.bf16.mxu0 0
        %250 = vmatpush1.bf16.msra.mxu0 0
        %251 = vmatprep.subr.bf16.mxu0 0
        %252 = vmatpush1.bf16.msra.mxu0 0
        %253 = vmatprep.subr.bf16.mxu0 0
        %254 = vmatpush1.bf16.msra.mxu0 0
        %255 = vmatprep.mubr.bf16.mxu0 0
        %256 = vmatmul.mubr.bf16.gmra.mrb[0].mxu0 %v218
        %v257 = vpop.f32.mrb[0].mxu0
        %v258 = vadd.f32 0.0, %v257
        %v259 = vpop.f32.mrb[0].mxu0
        %v260 = vpop.f32.mrb[0].mxu0
        %v261 = vadd.f32 0.0, %v260
        %v262 = vpop.f32.mrb[0].mxu0
        %263 = vmatprep.mubr.bf16.mxu0 0
        %264 = vmatmul.mubr.bf16.gmra.mrb[0].mxu0 %v221
        %v265 = vpop.f32.mrb[0].mxu0
        %v266 = vadd.f32 0.0, %v265
        %v267 = vpop.f32.mrb[0].mxu0
        %v268 = vpop.f32.mrb[0].mxu0
        %v269 = vadd.f32 0.0, %v268
        %v270 = vpop.f32.mrb[0].mxu0
        %271 = vdwg.mxu0
        %s272 = smul.u32 %s16, 32
        %v273 = vlaneseq
        %v274 = vshrl.u32 %v273, 7
        %v275 = vadd.s32 %v274, 8
        %v276 = vadd.s32 %v274, 16
        %v277 = vadd.s32 %v274, 24
        %v278 = vstv %s272
        %v279 = vadd.s32 %v278, %v274
        %v280 = vadd.s32 %v278, %v275
        %v281 = vadd.s32 %v278, %v276
        %v282 = vadd.s32 %v278, %v277
        %vm283 = vcmp.lt.s32.totalorder %v279, 60
        %vm284 = vcmp.lt.s32.totalorder %v280, 60
        %vm285 = vcmp.lt.s32.totalorder %v281, 60
        %vm286 = vcmp.lt.s32.totalorder %v282, 60
        %v287 = vsel %vm283, 1, 0
        %v288 = vsel %vm284, 1, 0
        %v289 = vsel %vm285, 1, 0
        %v290 = vsel %vm286, 1, 0
        %vm291 = vcmp.eq.s32.totalorder %v287, 1
        %vm292 = vcmp.eq.s32.totalorder %v288, 1
        %vm293 = vcmp.eq.s32.totalorder %v289, 1
        %vm294 = vcmp.eq.s32.totalorder %v290, 1
        %v295 = vsel %vm291, %v258, 0.0
        %v296 = vsel %vm292, %v261, 0.0
        %v297 = vsel %vm293, %v266, 0.0
        %v298 = vsel %vm294, %v269, 0.0
        %v299 = vld [vmem:[#allocation2] sm:$0x1]
        %v300 = vsel %vm216, %v295, 0.0
        %v301 = vsel %vm216, %v296, 0.0
        %v302 = vadd.f32 %v300, %v301
        %v303 = vsel %vm216, %v297, 0.0
        %v304 = vadd.f32 %v302, %v303
        %v305 = vsel %vm216, %v298, 0.0
        %v306 = vadd.f32 %v304, %v305
        %v307 = vrot.slane %v306, 4
        %v308 = vadd.f32 %v306, %v307
        %v309 = vrot.slane %v308, 2
        %v310 = vadd.f32 %v308, %v309
        %v311 = vrot.slane %v310, 1
        %v312 = vadd.f32 %v310, %v311
        %v313 = vadd.f32 %v299, %v312
        %vm314 = vcmask 253952
        %315 = vst.msk [vmem:[#allocation2] sm:$0x1] %vm314, %v313
        %v316 = vld [vmem:[#allocation3] sm:$0x1]
        %v317 = vmul.f32 %v295, %v295
        %v318 = vmul.f32 %v296, %v296
        %v319 = vmul.f32 %v297, %v297
        %v320 = vmul.f32 %v298, %v298
        %v321 = vsel %vm216, %v317, 0.0
        %v322 = vsel %vm216, %v318, 0.0
        %v323 = vadd.f32 %v321, %v322
        %v324 = vsel %vm216, %v319, 0.0
        %v325 = vadd.f32 %v323, %v324
        %v326 = vsel %vm216, %v320, 0.0
        %v327 = vadd.f32 %v325, %v326
        %v328 = vrot.slane %v327, 4
        %v329 = vadd.f32 %v327, %v328
        %v330 = vrot.slane %v329, 2
        %v331 = vadd.f32 %v329, %v330
        %v332 = vrot.slane %v331, 1
        %v333 = vadd.f32 %v331, %v332
        %v334 = vadd.f32 %v316, %v333
        %335 = vst.msk [vmem:[#allocation3] sm:$0x1] %vm314, %v334
        %p336 = scmp.eq.s32.totalorder %s16, 1
        // Predicated region
        $region41: #{tpu_custom_call.1} parent=35 // pred_check
          %p337 = pneg %p336
        $region42: #{tpu_custom_call.1} parent=35 // pred_check_branch
          %339 = sbr.rel (%p337) target = $region44
        $region43: #{tpu_custom_call.1} parent=35 // pred_region
          %v340 = vld [vmem:[#allocation2] sm:$0x1]
          %v341 = vmul.f32 %v340, 0.016666668
          %v342 = vld [vmem:[#allocation3] sm:$0x1]
          %v343 = vmul.f32 %v342, 0.016666668
          %v344 = vmul.f32 %v341, %v341
          %v345 = vsub.f32 %v343, %v344
          %v346 = vmax.f32 %v345, 0.0
          %v347 = vadd.f32 %v346, 1e-05
          %v348 = vrsqrt.pop %v347
          %v349 = vld [vmem:[%s2] sm:$0x1]
          %v350 = vmul.f32 %v349, %v348
          %351 = vst.msk [vmem:[#allocation4] sm:$0x1] %vm314, %v350
          %v352 = vld [vmem:[%s3] sm:$0x1]
          %v353 = vmul.f32 %v341, %v350
          %v354 = vsub.f32 %v352, %v353
          %355 = vst.msk [vmem:[#allocation4 + $0x1] sm:$0x1] %vm314, %v354
        $region44: #{tpu_custom_call.1} parent=35 // pred_fallthru
          _
        // Predicated region
        $region45: #{tpu_custom_call.1} parent=35 // pred_check
          %p356 = pneg %p118
        $region46: #{tpu_custom_call.1} parent=35 // pred_check_branch
          %358 = sbr.rel (%p356) target = $region48
        $region47: #{tpu_custom_call.1} parent=35 // pred_region
          %s360 = ssub.s32 32, 32
          %361 = vsyncadd [#allocation5], %s360
          %s363 = sshll.u32 [#allocation4], 4
          %s364 = int_to_ptr.vmem [resolvable:$true] %s363
          %366 = dma.vmem_to_hbm [thread:$0]  %s364, 32, %s4, [#allocation5]
        $region48: #{tpu_custom_call.1} parent=35 // pred_fallthru
          _
        // Predicated region
        $region49: #{tpu_custom_call.1} parent=35 // pred_check
          %p367 = pneg %p118
        $region50: #{tpu_custom_call.1} parent=35 // pred_check_branch
          %369 = sbr.rel (%p367) target = $region52
        $region51: #{tpu_custom_call.1} parent=35 // pred_region
          %370 = dma.done [#allocation5], 32
        $region52: #{tpu_custom_call.1} parent=35 // pred_fallthru
          _
      $region36: #{tpu_custom_call.1} parent=5 // pred_fallthru
        _
      %p371 = scmp.le.s32.totalorder 2, %s11
      // Predicated region
      $region53: #{tpu_custom_call.1} parent=5 // pred_check
        %p372 = pneg %p371
      $region54: #{tpu_custom_call.1} parent=5 // pred_check_branch
        %374 = sbr.rel (%p372) target = $region56
      $region55: #{tpu_custom_call.1} parent=5 // pred_region
        %s375 = ssub.s32 %s11, 2
      $region56: #{tpu_custom_call.1} parent=5 // pred_fallthru
        _
    $region6: #{tpu_custom_call.1} parent=1 // loop_footer
      %s15 = sadd.s32 1, %s11
    $region7: #{tpu_custom_call.1} parent=1 // loop_footer_branch
      %10 = sbr.rel target = $region3
    $region8: #{tpu_custom_call.1} parent=1 // loop_exit
      _
    %376 = vsyncpa [#allocation5], 1
    %s377 = scalar_lea.sflag [#allocation5], 1
    %378 = vsyncpa %s377, 1

// kernel: tpu_custom_call.1
$region0: #{tpu_custom_call.1}
  #allocation0 [shape = 'u32[]', space=smem, size = 0x4, offset = 0x4, fixed_abs, tag = 'smem constant byte address 0x4 - core index']
  #allocation1 [shape = 'u32[144,128]{1,0:T(1,128)}', space=vmem, size = 0x12000, scoped, tag = 'internal scratch']
  #allocation2 [shape = 'f32[1,32]{1,0:T(1,128)}', space=vmem, size = 0x200, scoped, tag = 'scratch operand']
  #allocation3 [shape = 'f32[1,32]{1,0:T(1,128)}', space=vmem, size = 0x200, scoped, tag = 'scratch operand']
  %s0 = inlined_call_operand.vmem [shape: f32[64,32], index: 0, kind: input, shape index: {}]
  %s1 = inlined_call_operand.vmem [shape: bf16[32,32], index: 1, kind: input, shape index: {}]
  %s2 = inlined_call_operand.vmem [shape: f32[1,32], index: 2, kind: input, shape index: {}]
  %s3 = inlined_call_operand.vmem [shape: f32[1,32], index: 3, kind: input, shape index: {}]
  %s4 = inlined_call_operand.hbm [shape: f32[2,32], index: 4, kind: output, shape index: {}]
  %s5 = sld [smem:[#allocation0]]
  $region57: #{tpu_custom_call.1} parent=0
    _
  %s7 = ssub.s32 1, %s5
  %s8 = scalar_select 0, %s7, %s5
  $region1: #{tpu_custom_call.1} parent=0
    #allocation4 [shape = 'u8[1024]{0}', space=vmem, size = 0x400, scoped, tag = 'output window, operand 0, single buffered']
    #allocation5 [shape = 's32[2]{0}', space=sflag, size = 0x8, scoped, tag = 'scoped memory for tpu_custom_call.1']
    %9 = vsyncpa [#allocation5], 0
    loop: start=0, step=1, limit=4
    $region2: #{tpu_custom_call.1} parent=1 // loop_pre_header
      _
    $region3: #{tpu_custom_call.1} parent=1 // loop_header
      %s11 = sphi 0, %s15
      %p12 = scmp.ge.s32.totalorder %s11, 4
      %s21 = sphi 0, %s23
      %s24 = sphi 0, %s21
      %s25 = sphi 0, %s24
      %s41 = sphi 0, %s25
      %s45 = sphi 0, %s45
      %s47 = sphi 0, %s45
      %s48 = sphi 0, %s47
      %s62 = sphi 0, %s48
      %s66 = sphi 0, %s66
      %s68 = sphi 0, %s66
      %s69 = sphi 0, %s68
      %s83 = sphi 0, %s69
      %s87 = sphi 0, %s87
      %s89 = sphi 0, %s87
      %s90 = sphi 0, %s89
      %s104 = sphi 0, %s90
      %s108 = sphi 0, %s108
      %s110 = sphi 0, %s108
      %s111 = sphi 0, %s110
      %s125 = sphi 0, %s111
    $region4: #{tpu_custom_call.1} parent=1 // loop_header_branch
      %14 = sbr.rel (%p12) target = $region8
    $region5: #{tpu_custom_call.1} parent=1 // loop_body
      %s16 = ssub.s32 %s11, 1
      %s17 = ssub.s32 %s11, 2
      %s18 = sadd.s32 %s11, 1
      %s19 = ssub.s32 %s11, %s18
      %p20 = scmp.eq.s32.totalorder %s19, 0
      %s22 = sadd.s32 %s21, 1
      %s23 = scalar_select %p20, %s21, %s22
      %p26 = pneg %p20
      %p27 = scmp.eq.s32.totalorder %s11, 1
      %p28 = por %p26, %p27
      %p29 = scmp.ne.s32.totalorder %s21, %s24
      %p30 = scmp.eq.s32.totalorder %s11, 0
      %p31 = por %p29, %p30
      %p32 = scmp.ne.s32.totalorder %s21, %s24
      %p33 = scmp.eq.s32.totalorder %s16, 1
      %p34 = por %p32, %p33
      %p35 = scmp.ne.s32.totalorder %s24, %s25
      %p36 = scmp.eq.s32.totalorder %s16, 0
      %p37 = por %p35, %p36
      %p38 = scmp.ne.s32.totalorder %s24, %s25
      %p39 = scmp.eq.s32.totalorder %s17, 1
      %p40 = por %p38, %p39
      %p42 = scmp.ne.s32.totalorder %s25, %s41
      %p43 = scmp.eq.s32.totalorder %s17, 0
      %p44 = por %p42, %p43
      %s46 = sadd.s32 %s45, 1
      %p49 = scmp.eq.s32.totalorder %s11, 1
      %p50 = scmp.ne.s32.totalorder %s45, %s47
      %p51 = scmp.eq.s32.totalorder %s11, 0
      %p52 = por %p50, %p51
      %p53 = scmp.ne.s32.totalorder %s45, %s47
      %p54 = scmp.eq.s32.totalorder %s16, 1
      %p55 = por %p53, %p54
      %p56 = scmp.ne.s32.totalorder %s47, %s48
      %p57 = scmp.eq.s32.totalorder %s16, 0
      %p58 = por %p56, %p57
      %p59 = scmp.ne.s32.totalorder %s47, %s48
      %p60 = scmp.eq.s32.totalorder %s17, 1
      %p61 = por %p59, %p60
      %p63 = scmp.ne.s32.totalorder %s48, %s62
      %p64 = scmp.eq.s32.totalorder %s17, 0
      %p65 = por %p63, %p64
      %s67 = sadd.s32 %s66, 1
      %p70 = scmp.eq.s32.totalorder %s11, 1
      %p71 = scmp.ne.s32.totalorder %s66, %s68
      %p72 = scmp.eq.s32.totalorder %s11, 0
      %p73 = por %p71, %p72
      %p74 = scmp.ne.s32.totalorder %s66, %s68
      %p75 = scmp.eq.s32.totalorder %s16, 1
      %p76 = por %p74, %p75
      %p77 = scmp.ne.s32.totalorder %s68, %s69
      %p78 = scmp.eq.s32.totalorder %s16, 0
      %p79 = por %p77, %p78
      %p80 = scmp.ne.s32.totalorder %s68, %s69
      %p81 = scmp.eq.s32.totalorder %s17, 1
      %p82 = por %p80, %p81
      %p84 = scmp.ne.s32.totalorder %s69, %s83
      %p85 = scmp.eq.s32.totalorder %s17, 0
      %p86 = por %p84, %p85
      %s88 = sadd.s32 %s87, 1
      %p91 = scmp.eq.s32.totalorder %s11, 1
      %p92 = scmp.ne.s32.totalorder %s87, %s89
      %p93 = scmp.eq.s32.totalorder %s11, 0
      %p94 = por %p92, %p93
      %p95 = scmp.ne.s32.totalorder %s87, %s89
      %p96 = scmp.eq.s32.totalorder %s16, 1
      %p97 = por %p95, %p96
      %p98 = scmp.ne.s32.totalorder %s89, %s90
      %p99 = scmp.eq.s32.totalorder %s16, 0
      %p100 = por %p98, %p99
      %p101 = scmp.ne.s32.totalorder %s89, %s90
      %p102 = scmp.eq.s32.totalorder %s17, 1
      %p103 = por %p101, %p102
      %p105 = scmp.ne.s32.totalorder %s90, %s104
      %p106 = scmp.eq.s32.totalorder %s17, 0
      %p107 = por %p105, %p106
      %s109 = sadd.s32 %s108, 1
      %p112 = scmp.eq.s32.totalorder %s11, 1
      %p113 = scmp.ne.s32.totalorder %s108, %s110
      %p114 = scmp.eq.s32.totalorder %s11, 0
      %p115 = por %p113, %p114
      %p116 = scmp.ne.s32.totalorder %s108, %s110
      %p117 = scmp.eq.s32.totalorder %s16, 1
      %p118 = por %p116, %p117
      %p119 = scmp.ne.s32.totalorder %s110, %s111
      %p120 = scmp.eq.s32.totalorder %s16, 0
      %p121 = por %p119, %p120
      %p122 = scmp.ne.s32.totalorder %s110, %s111
      %p123 = scmp.eq.s32.totalorder %s17, 1
      %p124 = por %p122, %p123
      %p126 = scmp.ne.s32.totalorder %s111, %s125
      %p127 = scmp.eq.s32.totalorder %s17, 0
      %p128 = por %p126, %p127
      %p129 = scmp.le.s32.totalorder 1, %s11
      %p130 = scmp.lt.s32.totalorder %s11, 3
      %p131 = pnand %p129, %p130
      %p132 = pneg %p131
      // Predicated region
      $region9: #{tpu_custom_call.1} parent=5 // pred_check
        _
      $region10: #{tpu_custom_call.1} parent=5 // pred_check_branch
        %134 = sbr.rel (%p131) target = $region12
      $region11: #{tpu_custom_call.1} parent=5 // pred_region
        %s135 = ssub.s32 %s11, 1
        // Predicated region
        $region13: #{tpu_custom_call.1} parent=11 // pred_check
          %p136 = pneg %p58
        $region14: #{tpu_custom_call.1} parent=11 // pred_check_branch
          %138 = sbr.rel (%p136) target = $region16
        $region15: #{tpu_custom_call.1} parent=11 // pred_region
          _
        $region16: #{tpu_custom_call.1} parent=11 // pred_fallthru
          _
        // Predicated region
        $region17: #{tpu_custom_call.1} parent=11 // pred_check
          %p139 = pneg %p79
        $region18: #{tpu_custom_call.1} parent=11 // pred_check_branch
          %141 = sbr.rel (%p139) target = $region20
        $region19: #{tpu_custom_call.1} parent=11 // pred_region
          _
        $region20: #{tpu_custom_call.1} parent=11 // pred_fallthru
          _
        // Predicated region
        $region21: #{tpu_custom_call.1} parent=11 // pred_check
          %p142 = pneg %p100
        $region22: #{tpu_custom_call.1} parent=11 // pred_check_branch
          %144 = sbr.rel (%p142) target = $region24
        $region23: #{tpu_custom_call.1} parent=11 // pred_region
          _
        $region24: #{tpu_custom_call.1} parent=11 // pred_fallthru
          _
      $region12: #{tpu_custom_call.1} parent=5 // pred_fallthru
        _
      %p145 = scmp.lt.s32.totalorder %s11, 2
      // Predicated region
      $region25: #{tpu_custom_call.1} parent=5 // pred_check
        %p146 = pneg %p145
      $region26: #{tpu_custom_call.1} parent=5 // pred_check_branch
        %148 = sbr.rel (%p146) target = $region28
      $region27: #{tpu_custom_call.1} parent=5 // pred_region
        // Predicated region
        $region29: #{tpu_custom_call.1} parent=27 // pred_check
          %p149 = pneg %p31
        $region30: #{tpu_custom_call.1} parent=27 // pred_check_branch
          %151 = sbr.rel (%p149) target = $region32
        $region31: #{tpu_custom_call.1} parent=27 // pred_region
          %s152 = smul.u32 4, %s11
          %p153 = scmp.lt.s32.totalorder %s152, 7
          %s154 = scalar_select %p153, %s152, 7
          %s155 = smul.addr %s154, 8
          %s156 = scalar_lea.vmem %s0, %s155
          %s157 = smul.u32 4, %s11
        $region32: #{tpu_custom_call.1} parent=27 // pred_fallthru
          _
      $region28: #{tpu_custom_call.1} parent=5 // pred_fallthru
        _
      %p158 = scmp.le.s32.totalorder 1, %s11
      %p159 = scmp.lt.s32.totalorder %s11, 3
      %p160 = pnand %p158, %p159
      %p161 = pneg %p160
      // Predicated region
      $region33: #{tpu_custom_call.1} parent=5 // pred_check
        _
      $region34: #{tpu_custom_call.1} parent=5 // pred_check_branch
        %163 = sbr.rel (%p160) target = $region36
      $region35: #{tpu_custom_call.1} parent=5 // pred_region
        %s164 = ssub.s32 %s11, 1
        %s165 = smul.u32 4, %s16
        %p166 = scmp.lt.s32.totalorder %s165, 7
        %s167 = scalar_select %p166, %s165, 7
        %s168 = smul.addr %s167, 8
        %s169 = scalar_lea.vmem %s0, %s168
        %p170 = pneg %p37
        %p171 = pneg %p34
        %p172 = pneg %p58
        %p173 = pneg %p55
        %p174 = pneg %p79
        %p175 = pneg %p76
        %p176 = pneg %p100
        %p177 = pneg %p97
        %p178 = pneg %p121
        %p179 = pneg %p118
        %s180 = smul.u32 4, %s16
        %p181 = scmp.lt.s32.totalorder %s180, 7
        %s182 = scalar_select %p181, %s180, 7
        %s183 = smul.addr %s182, 8
        %s184 = scalar_lea.vmem %s0, %s183
        %s185 = smul.u32 4, %s16
        %p187 = scmp.eq.s32.totalorder %s16, 0
        // Predicated region
        $region37: #{tpu_custom_call.1} parent=35 // pred_check
          %p188 = pneg %p187
        $region38: #{tpu_custom_call.1} parent=35 // pred_check_branch
          %190 = sbr.rel (%p188) target = $region40
        $region39: #{tpu_custom_call.1} parent=35 // pred_region
          %vm191 = vcmask 253952
          %192 = vst.msk [vmem:[#allocation2] sm:$0x1] %vm191, 0.0
          %193 = vst.msk [vmem:[#allocation3] sm:$0x1] %vm191, 0.0
        $region40: #{tpu_custom_call.1} parent=35 // pred_fallthru
          _
        %v194 = vld [vmem:[%s184] sm:$0xff]
        %v195 = vld [vmem:[%s184 + $0x8] sm:$0xff]
        %v196 = vld [vmem:[%s184 + $0x10] sm:$0xff]
        %v197 = vld [vmem:[%s184 + $0x18] sm:$0xff]
        %v198 = vpack.c.bf16 %v195, %v194
        %v199 = vpack.c.bf16 %v197, %v196
        %v200 = vld [vmem:[%s1] sm:$0xf]
        %v201 = vld [vmem:[%s1 + $0x4] sm:$0xf]
        %v202 = vld [vmem:[%s1 + $0x8] sm:$0xf]
        %v203 = vld [vmem:[%s1 + $0xc] sm:$0xf]
        %v208 = vunpack.c.l.b16 %v200
        %v209 = vunpack.c.l.b16 %v201
        %v210 = vunpack.c.l.b16 %v202
        %v211 = vunpack.c.l.b16 %v203
        %v212 = vpack.c.b16 %v209, %v208
        %v213 = vpack.c.b16 %v211, %v210
        %vm216 = vcmask 261120
        %v218 = vsel %vm216, %v198, 0
        %v221 = vsel %vm216, %v199, 0
        %223 = vmatprep.subr.bf16.mxu0 0
        %224 = vmatpush1.bf16.msra.mxu0 %v212
        %225 = vmatprep.subr.bf16.mxu0 0
        %226 = vmatpush1.bf16.msra.mxu0 %v213
        %227 = vmatprep.subr.bf16.mxu0 0
        %228 = vmatpush1.bf16.msra.mxu0 0
        %229 = vmatprep.subr.bf16.mxu0 0
        %230 = vmatpush1.bf16.msra.mxu0 0
        %231 = vmatprep.subr.bf16.mxu0 0
        %232 = vmatpush1.bf16.msra.mxu0 0
        %233 = vmatprep.subr.bf16.mxu0 0
        %234 = vmatpush1.bf16.msra.mxu0 0
        %235 = vmatprep.subr.bf16.mxu0 0
        %236 = vmatpush1.bf16.msra.mxu0 0
        %237 = vmatprep.subr.bf16.mxu0 0
        %238 = vmatpush1.bf16.msra.mxu0 0
        %239 = vmatprep.subr.bf16.mxu0 0
        %240 = vmatpush1.bf16.msra.mxu0 0
        %241 = vmatprep.subr.bf16.mxu0 0
        %242 = vmatpush1.bf16.msra.mxu0 0
        %243 = vmatprep.subr.bf16.mxu0 0
        %244 = vmatpush1.bf16.msra.mxu0 0
        %245 = vmatprep.subr.bf16.mxu0 0
        %246 = vmatpush1.bf16.msra.mxu0 0
        %247 = vmatprep.subr.bf16.mxu0 0
        %248 = vmatpush1.bf16.msra.mxu0 0
        %249 = vmatprep.subr.bf16.mxu0 0
        %250 = vmatpush1.bf16.msra.mxu0 0
        %251 = vmatprep.subr.bf16.mxu0 0
        %252 = vmatpush1.bf16.msra.mxu0 0
        %253 = vmatprep.subr.bf16.mxu0 0
        %254 = vmatpush1.bf16.msra.mxu0 0
        %255 = vmatprep.mubr.bf16.mxu0 0
        %256 = vmatmul.mubr.bf16.gmra.mrb[0].mxu0 %v218
        %v257 = vpop.f32.mrb[0].mxu0
        %v258 = vadd.f32 0.0, %v257
        %v259 = vpop.f32.mrb[0].mxu0
        %v260 = vpop.f32.mrb[0].mxu0
        %v261 = vadd.f32 0.0, %v260
        %v262 = vpop.f32.mrb[0].mxu0
        %263 = vmatprep.mubr.bf16.mxu0 0
        %264 = vmatmul.mubr.bf16.gmra.mrb[0].mxu0 %v221
        %v265 = vpop.f32.mrb[0].mxu0
        %v266 = vadd.f32 0.0, %v265
        %v267 = vpop.f32.mrb[0].mxu0
        %v268 = vpop.f32.mrb[0].mxu0
        %v269 = vadd.f32 0.0, %v268
        %v270 = vpop.f32.mrb[0].mxu0
        %271 = vdwg.mxu0
        %s272 = smul.u32 %s16, 32
        %v273 = vlaneseq
        %v274 = vshrl.u32 %v273, 7
        %v275 = vadd.s32 %v274, 8
        %v276 = vadd.s32 %v274, 16
        %v277 = vadd.s32 %v274, 24
        %v278 = vstv %s272
        %v279 = vadd.s32 %v278, %v274
        %v280 = vadd.s32 %v278, %v275
        %v281 = vadd.s32 %v278, %v276
        %v282 = vadd.s32 %v278, %v277
        %vm283 = vcmp.lt.s32.totalorder %v279, 60
        %vm284 = vcmp.lt.s32.totalorder %v280, 60
        %vm285 = vcmp.lt.s32.totalorder %v281, 60
        %vm286 = vcmp.lt.s32.totalorder %v282, 60
        %v287 = vsel %vm283, 1, 0
        %v288 = vsel %vm284, 1, 0
        %v289 = vsel %vm285, 1, 0
        %v290 = vsel %vm286, 1, 0
        %vm291 = vcmp.eq.s32.totalorder %v287, 1
        %vm292 = vcmp.eq.s32.totalorder %v288, 1
        %vm293 = vcmp.eq.s32.totalorder %v289, 1
        %vm294 = vcmp.eq.s32.totalorder %v290, 1
        %v295 = vsel %vm291, %v258, 0.0
        %v296 = vsel %vm292, %v261, 0.0
        %v297 = vsel %vm293, %v266, 0.0
        %v298 = vsel %vm294, %v269, 0.0
        %v299 = vld [vmem:[#allocation2] sm:$0x1]
        %v300 = vsel %vm216, %v295, 0.0
        %v301 = vsel %vm216, %v296, 0.0
        %v302 = vadd.f32 %v300, %v301
        %v303 = vsel %vm216, %v297, 0.0
        %v304 = vadd.f32 %v302, %v303
        %v305 = vsel %vm216, %v298, 0.0
        %v306 = vadd.f32 %v304, %v305
        %v307 = vrot.slane %v306, 4
        %v308 = vadd.f32 %v306, %v307
        %v309 = vrot.slane %v308, 2
        %v310 = vadd.f32 %v308, %v309
        %v311 = vrot.slane %v310, 1
        %v312 = vadd.f32 %v310, %v311
        %v313 = vadd.f32 %v299, %v312
        %vm314 = vcmask 253952
        %315 = vst.msk [vmem:[#allocation2] sm:$0x1] %vm314, %v313
        %v316 = vld [vmem:[#allocation3] sm:$0x1]
        %v317 = vmul.f32 %v295, %v295
        %v318 = vmul.f32 %v296, %v296
        %v319 = vmul.f32 %v297, %v297
        %v320 = vmul.f32 %v298, %v298
        %v321 = vsel %vm216, %v317, 0.0
        %v322 = vsel %vm216, %v318, 0.0
        %v323 = vadd.f32 %v321, %v322
        %v324 = vsel %vm216, %v319, 0.0
        %v325 = vadd.f32 %v323, %v324
        %v326 = vsel %vm216, %v320, 0.0
        %v327 = vadd.f32 %v325, %v326
        %v328 = vrot.slane %v327, 4
        %v329 = vadd.f32 %v327, %v328
        %v330 = vrot.slane %v329, 2
        %v331 = vadd.f32 %v329, %v330
        %v332 = vrot.slane %v331, 1
        %v333 = vadd.f32 %v331, %v332
        %v334 = vadd.f32 %v316, %v333
        %335 = vst.msk [vmem:[#allocation3] sm:$0x1] %vm314, %v334
        %p336 = scmp.eq.s32.totalorder %s16, 1
        // Predicated region
        $region41: #{tpu_custom_call.1} parent=35 // pred_check
          %p337 = pneg %p336
        $region42: #{tpu_custom_call.1} parent=35 // pred_check_branch
          %339 = sbr.rel (%p337) target = $region44
        $region43: #{tpu_custom_call.1} parent=35 // pred_region
          %v340 = vld [vmem:[#allocation2] sm:$0x1]
          %v341 = vmul.f32 %v340, 0.016666668
          %v342 = vld [vmem:[#allocation3] sm:$0x1]
          %v343 = vmul.f32 %v342, 0.016666668
          %v344 = vmul.f32 %v341, %v341
          %v345 = vsub.f32 %v343, %v344
          %v346 = vmax.f32 %v345, 0.0
          %v347 = vadd.f32 %v346, 1e-05
          %v348 = vrsqrt.pop %v347
          %v349 = vld [vmem:[%s2] sm:$0x1]
          %v350 = vmul.f32 %v349, %v348
          %351 = vst.msk [vmem:[#allocation4] sm:$0x1] %vm314, %v350
          %v352 = vld [vmem:[%s3] sm:$0x1]
          %v353 = vmul.f32 %v341, %v350
          %v354 = vsub.f32 %v352, %v353
          %355 = vst.msk [vmem:[#allocation4 + $0x1] sm:$0x1] %vm314, %v354
        $region44: #{tpu_custom_call.1} parent=35 // pred_fallthru
          _
        // Predicated region
        $region45: #{tpu_custom_call.1} parent=35 // pred_check
          %p356 = pneg %p118
        $region46: #{tpu_custom_call.1} parent=35 // pred_check_branch
          %358 = sbr.rel (%p356) target = $region48
        $region47: #{tpu_custom_call.1} parent=35 // pred_region
          %s360 = ssub.s32 32, 32
          %361 = vsyncadd [#allocation5], %s360
          %s363 = sshll.u32 [#allocation4], 4
          %s364 = int_to_ptr.vmem [resolvable:$true] %s363
          %366 = dma.vmem_to_hbm [thread:$0]  %s364, 32, %s4, [#allocation5]
        $region48: #{tpu_custom_call.1} parent=35 // pred_fallthru
          _
        // Predicated region
        $region49: #{tpu_custom_call.1} parent=35 // pred_check
          %p367 = pneg %p118
        $region50: #{tpu_custom_call.1} parent=35 // pred_check_branch
          %369 = sbr.rel (%p367) target = $region52
        $region51: #{tpu_custom_call.1} parent=35 // pred_region
          %370 = dma.done [#allocation5], 32
        $region52: #{tpu_custom_call.1} parent=35 // pred_fallthru
          _
      $region36: #{tpu_custom_call.1} parent=5 // pred_fallthru
        _
      %p371 = scmp.le.s32.totalorder 2, %s11
      // Predicated region
      $region53: #{tpu_custom_call.1} parent=5 // pred_check
        %p372 = pneg %p371
      $region54: #{tpu_custom_call.1} parent=5 // pred_check_branch
        %374 = sbr.rel (%p372) target = $region56
      $region55: #{tpu_custom_call.1} parent=5 // pred_region
        %s375 = ssub.s32 %s11, 2
      $region56: #{tpu_custom_call.1} parent=5 // pred_fallthru
        _
    $region6: #{tpu_custom_call.1} parent=1 // loop_footer
      %s15 = sadd.s32 1, %s11
    $region7: #{tpu_custom_call.1} parent=1 // loop_footer_branch
      %10 = sbr.rel target = $region3
    $region8: #{tpu_custom_call.1} parent=1 // loop_exit
      _
    %376 = vsyncpa [#allocation5], 1
    %s377 = scalar_lea.sflag [#allocation5], 1
    %378 = vsyncpa %s377, 1

</llo_original>
